<compile_context>
chip_gen: v6e
topology: v6e:2x2x1
jax: 0.10.0
libtpu: 0.0.40
codegen_flags: <defaults>
</compile_context>

<pallas_src>
import functools
import math

import jax
import jax.numpy as jnp
from jax.experimental import pallas as pl
from jax.experimental.pallas import tpu as pltpu


# --------------------------------------------------------------------------
# Tile-size helper
# --------------------------------------------------------------------------

def _pick_tile(dim, preferred, align):
    """Largest tile <= preferred that divides `dim` and is a multiple of
    `align`; falls back to the full dimension (always a legal block shape)."""
    if dim <= preferred:
        return dim
    t = (preferred // align) * align
    while t >= align:
        if dim % t == 0:
            return t
        t -= align
    return dim


# --------------------------------------------------------------------------
# Tiled linear (optionally fused ReLU) — QKV / KV / WO / FFN / fc_out
# --------------------------------------------------------------------------

def _linear_kernel(x_ref, w_ref, b_ref, o_ref, acc_ref, *, relu):
    @pl.when(pl.program_id(2) == 0)
    def _():
        acc_ref[...] = jnp.zeros_like(acc_ref)

    # bf16 x bf16 -> f32 accumulate on the MXU
    acc_ref[...] += jnp.dot(x_ref[...], w_ref[...],
                            preferred_element_type=jnp.float32)

    @pl.when(pl.program_id(2) == pl.num_programs(2) - 1)
    def _():
        y = acc_ref[...] + b_ref[...]
        if relu:
            y = jnp.maximum(y, 0.0)
        o_ref[...] = y.astype(o_ref.dtype)


def linear(x, w, b, *, relu=False, out_dtype=jnp.bfloat16):
    # x: (M, K) bf16, w: (K, N) bf16, b: (N,) f32 -> (M, N) out_dtype
    M, K = x.shape
    N = w.shape[1]
    tm = _pick_tile(M, 512, 8)      # rows: 8-aligned
    tn = _pick_tile(N, 256, 128)    # lanes: 256 preferred for v6e/v7x MXU
    tk = _pick_tile(K, 512, 128)
    grid = (M // tm, N // tn, K // tk)
    return pl.pallas_call(
        functools.partial(_linear_kernel, relu=relu),
        out_shape=jax.ShapeDtypeStruct((M, N), out_dtype),
        grid=grid,
        in_specs=[pl.BlockSpec((tm, tk), lambda i, j, k: (i, k)),
                  pl.BlockSpec((tk, tn), lambda i, j, k: (k, j)),
                  pl.BlockSpec((1, tn), lambda i, j, k: (0, j))],
        out_specs=pl.BlockSpec((tm, tn), lambda i, j, k: (i, j)),
        scratch_shapes=[pltpu.VMEM((tm, tn), jnp.float32)],
        compiler_params=pltpu.CompilerParams(
            dimension_semantics=("parallel", "parallel", "arbitrary")),
    )(x, w, b.reshape(1, N).astype(jnp.float32))


# --------------------------------------------------------------------------
# Fused residual-add + LayerNorm (f32 stats, bf16 I/O)
# --------------------------------------------------------------------------

def _add_ln_kernel(x_ref, y_ref, g_ref, b_ref, o_ref, *, eps):
    x = x_ref[...].astype(jnp.float32) + y_ref[...].astype(jnp.float32)
    mu = jnp.mean(x, axis=-1, keepdims=True)
    xc = x - mu
    var = jnp.mean(xc * xc, axis=-1, keepdims=True)
    y = xc * jax.lax.rsqrt(var + eps) * g_ref[...] + b_ref[...]
    o_ref[...] = y.astype(o_ref.dtype)


def add_norm(x, sub, p, eps=1e-5):
    B, S, D = x.shape
    N = B * S
    tm = _pick_tile(N, 512, 8)
    y = pl.pallas_call(
        functools.partial(_add_ln_kernel, eps=eps),
        out_shape=jax.ShapeDtypeStruct((N, D), jnp.bfloat16),
        grid=(N // tm,),
        in_specs=[pl.BlockSpec((tm, D), lambda i: (i, 0)),
                  pl.BlockSpec((tm, D), lambda i: (i, 0)),
                  pl.BlockSpec((1, D), lambda i: (0, 0)),
                  pl.BlockSpec((1, D), lambda i: (0, 0))],
        out_specs=pl.BlockSpec((tm, D), lambda i: (i, 0)),
        compiler_params=pltpu.CompilerParams(
            dimension_semantics=("parallel",)),
    )(x.reshape(N, D), sub.reshape(N, D),
      p["gamma"].reshape(1, D).astype(jnp.float32),
      p["beta"].reshape(1, D).astype(jnp.float32))
    return y.reshape(B, S, D)


# --------------------------------------------------------------------------
# Flash-style multi-head attention
#   grid = (batch, head, q-tile, kv-tile); online softmax in f32 VMEM scratch
# --------------------------------------------------------------------------

def _mha_kernel(q_ref, k_ref, v_ref, m_ref, o_ref,
                m_sc, l_sc, acc_sc, *, scale):
    kv_i = pl.program_id(3)

    @pl.when(kv_i == 0)
    def _():
        # -1e30 (not -inf) so alpha = exp(m_prev - m_new) never becomes NaN.
        m_sc[...] = jnp.full_like(m_sc, -1e30)
        l_sc[...] = jnp.zeros_like(l_sc)
        acc_sc[...] = jnp.zeros_like(acc_sc)

    q = q_ref[0, 0]                        # (tq, dh)  bf16
    k = k_ref[0, 0]                        # (tkv, dh) bf16
    v = v_ref[0, 0]                        # (tkv, dh) bf16

    # QK^T with no in-kernel transpose: contract the last dims directly.
    s = jax.lax.dot_general(q, k, (((1,), (1,)), ((), ())),
                            preferred_element_type=jnp.float32) * scale
    # int8 mask (1 = attend, 0 = masked) -> additive bias
    s = s + jnp.where(m_ref[0] != 0, 0.0, -1e9)

    m_prev = m_sc[...]
    m_new = jnp.maximum(m_prev, jnp.max(s, axis=-1, keepdims=True))
    alpha = jnp.exp(m_prev - m_new)
    p = jnp.exp(s - m_new)
    l_sc[...] = alpha * l_sc[...] + jnp.sum(p, axis=-1, keepdims=True)
    acc_sc[...] = alpha * acc_sc[...] + jnp.dot(
        p.astype(jnp.bfloat16), v, preferred_element_type=jnp.float32)
    m_sc[...] = m_new

    @pl.when(kv_i == pl.num_programs(3) - 1)
    def _():
        inv = pl.reciprocal(l_sc[...], approx=True)
        o_ref[0, 0] = (acc_sc[...] * inv).astype(o_ref.dtype)


def attention(q, k, v, mask):
    # q: (B, H, Sq, dh) bf16; k/v: (B, H, Sk, dh) bf16; mask: (B, Sq, Sk) int8
    B, H, Sq, dh = q.shape
    Sk = k.shape[2]
    scale = 1.0 / math.sqrt(dh)
    tq = _pick_tile(Sq, 256, 8)
    tkv = _pick_tile(Sk, 512, 128)
    grid = (B, H, Sq // tq, Sk // tkv)
    return pl.pallas_call(
        functools.partial(_mha_kernel, scale=scale),
        out_shape=jax.ShapeDtypeStruct((B, H, Sq, dh), jnp.bfloat16),
        grid=grid,
        in_specs=[
            pl.BlockSpec((1, 1, tq, dh), lambda b, h, qi, ki: (b, h, qi, 0)),
            pl.BlockSpec((1, 1, tkv, dh), lambda b, h, qi, ki: (b, h, ki, 0)),
            pl.BlockSpec((1, 1, tkv, dh), lambda b, h, qi, ki: (b, h, ki, 0)),
            pl.BlockSpec((1, tq, tkv), lambda b, h, qi, ki: (b, qi, ki)),
        ],
        out_specs=pl.BlockSpec((1, 1, tq, dh),
                               lambda b, h, qi, ki: (b, h, qi, 0)),
        scratch_shapes=[pltpu.VMEM((tq, 1), jnp.float32),
                        pltpu.VMEM((tq, 1), jnp.float32),
                        pltpu.VMEM((tq, dh), jnp.float32)],
        compiler_params=pltpu.CompilerParams(
            dimension_semantics=("parallel", "parallel", "parallel",
                                 "arbitrary")),
    )(q, k, v, mask)


def self_attention(x, mask, p, n_heads):
    B, S, D = x.shape
    dh = D // n_heads
    # Fused Q/K/V projection: one (D, 3D) matmul.
    qkv = linear(x.reshape(B * S, D), p["wqkv"], p["bqkv"])      # (B*S, 3D)
    # TODO(synk): head split/merge is plain-JAX layout plumbing (XLA transpose).
    qkv = jnp.transpose(qkv.reshape(B, S, 3, n_heads, dh), (2, 0, 3, 1, 4))
    o = attention(qkv[0], qkv[1], qkv[2], mask)                  # (B,H,S,dh)
    o = jnp.transpose(o, (0, 2, 1, 3)).reshape(B * S, D)
    o = linear(o, p["wo"], p["bo"])
    return o.reshape(B, S, D)


def cross_attention(x_q, x_kv, mask, p, n_heads):
    B, Sq, D = x_q.shape
    Sk = x_kv.shape[1]
    dh = D // n_heads
    q = linear(x_q.reshape(B * Sq, D), p["wq"], p["bq"])
    kv = linear(x_kv.reshape(B * Sk, D), p["wkv"], p["bkv"])     # (B*Sk, 2D)
    q = jnp.transpose(q.reshape(B, Sq, n_heads, dh), (0, 2, 1, 3))
    kv = jnp.transpose(kv.reshape(B, Sk, 2, n_heads, dh), (2, 0, 3, 1, 4))
    o = attention(q, kv[0], kv[1], mask)
    o = jnp.transpose(o, (0, 2, 1, 3)).reshape(B * Sq, D)
    o = linear(o, p["wo"], p["bo"])
    return o.reshape(B, Sq, D)


def feed_forward(x, p):
    B, S, D = x.shape
    h = linear(x.reshape(B * S, D), p["w1"], p["b1"], relu=True)
    y = linear(h, p["w2"], p["b2"])
    return y.reshape(B, S, D)


# --------------------------------------------------------------------------
# Encoder / decoder blocks
# --------------------------------------------------------------------------

def encoder_block(x, src_mask, p, n_heads):
    a = self_attention(x, src_mask, p["attn"], n_heads)
    x = add_norm(x, a, p["ln1"])
    f = feed_forward(x, p["ffn"])
    x = add_norm(x, f, p["ln2"])
    return x


def decoder_block(x, enc_out, tgt_mask, src_tgt_mask, p, n_heads):
    a = self_attention(x, tgt_mask, p["self_attn"], n_heads)
    x = add_norm(x, a, p["ln1"])
    c = cross_attention(x, enc_out, src_tgt_mask, p["cross_attn"], n_heads)
    x = add_norm(x, c, p["ln2"])
    f = feed_forward(x, p["ffn"])
    x = add_norm(x, f, p["ln3"])
    return x


def sinusoidal_pe(n_seq, d_model):
    pos = jnp.arange(n_seq, dtype=jnp.float32)[:, None]
    i = jnp.arange(0, d_model, 2, dtype=jnp.float32)[None, :]
    angle = pos / jnp.power(10000.0, i / d_model)
    pe = jnp.zeros((n_seq, d_model), jnp.float32)
    pe = pe.at[:, 0::2].set(jnp.sin(angle))
    pe = pe.at[:, 1::2].set(jnp.cos(angle))
    return pe


def embed(ids, table, pe, d_model):
    # TODO(synk): embedding gather stays in plain JAX (glue, not a hot matmul).
    x = jnp.take(table, ids, axis=0) * math.sqrt(d_model)
    x = x + pe[None, : ids.shape[1], :]
    return x.astype(jnp.bfloat16)   # dropout after embedding = identity


def transformer_forward(params, src, tgt, src_mask, tgt_mask, src_tgt_mask,
                        *, n_heads, d_model):
    # masks carried as int8 (1 = attend, 0 = masked) -> 4x less mask DMA
    src_mask = src_mask.astype(jnp.int8)
    tgt_mask = tgt_mask.astype(jnp.int8)
    src_tgt_mask = src_tgt_mask.astype(jnp.int8)

    pe = params["pos_enc"]
    # Encoder
    x = embed(src, params["src_emb"], pe, d_model)
    for blk in params["encoder"]:
        x = encoder_block(x, src_mask, blk, n_heads)
    enc_out = x
    # Decoder
    y = embed(tgt, params["tgt_emb"], pe, d_model)
    for blk in params["decoder"]:
        y = decoder_block(y, enc_out, tgt_mask, src_tgt_mask, blk, n_heads)
    # Final projection to vocab, emitted in f32
    B, S, D = y.shape
    out = linear(y.reshape(B * S, D), params["fc_out"]["w"],
                 params["fc_out"]["b"], out_dtype=jnp.float32)
    return out.reshape(B, S, -1)


# --------------------------------------------------------------------------
# Deterministic parameter init (f32, mirrors the PyTorch module) and a
# one-time inference-param preparation (bf16 weights, fused QKV / KV).
# --------------------------------------------------------------------------

def init_linear_params(key, din, dout):
    k1, k2 = jax.random.split(key)
    return {"w": jax.random.normal(k1, (din, dout), jnp.float32) * 0.02,
            "b": jax.random.normal(k2, (dout,), jnp.float32) * 0.02}


def init_ln_params(d):
    return {"gamma": jnp.ones((d,), jnp.float32),
            "beta": jnp.zeros((d,), jnp.float32)}


def init_attn_params(key, d_model):
    ks = jax.random.split(key, 4)
    return {"wq": init_linear_params(ks[0], d_model, d_model),
            "wk": init_linear_params(ks[1], d_model, d_model),
            "wv": init_linear_params(ks[2], d_model, d_model),
            "wo": init_linear_params(ks[3], d_model, d_model)}


def init_ffn_params(key, d_model, d_ff):
    k1, k2 = jax.random.split(key)
    return {"w1": init_linear_params(k1, d_model, d_ff),
            "w2": init_linear_params(k2, d_ff, d_model)}


def init_encoder_block(key, d_model, d_ff):
    k1, k2 = jax.random.split(key)
    return {"attn": init_attn_params(k1, d_model),
            "ffn": init_ffn_params(k2, d_model, d_ff),
            "ln1": init_ln_params(d_model),
            "ln2": init_ln_params(d_model)}


def init_decoder_block(key, d_model, d_ff):
    k1, k2, k3 = jax.random.split(key, 3)
    return {"self_attn": init_attn_params(k1, d_model),
            "cross_attn": init_attn_params(k2, d_model),
            "ffn": init_ffn_params(k3, d_model, d_ff),
            "ln1": init_ln_params(d_model),
            "ln2": init_ln_params(d_model),
            "ln3": init_ln_params(d_model)}


def init_transformer(key, vocab_size, n_seq, d_model, n_enc, n_dec):
    d_ff = 4 * d_model
    keys = jax.random.split(key, 3 + n_enc + n_dec)
    return {
        "src_emb": jax.random.normal(keys[0], (vocab_size, d_model),
                                     jnp.float32) * 0.02,
        "tgt_emb": jax.random.normal(keys[1], (vocab_size, d_model),
                                     jnp.float32) * 0.02,
        "pos_enc": sinusoidal_pe(n_seq, d_model),
        "fc_out": init_linear_params(keys[2], d_model, vocab_size),
        "encoder": [init_encoder_block(keys[3 + i], d_model, d_ff)
                    for i in range(n_enc)],
        "decoder": [init_decoder_block(keys[3 + n_enc + i], d_model, d_ff)
                    for i in range(n_dec)],
    }


def prepare_params(params):
    """One-time prep: bf16 matmul weights, fused QKV / KV weights (hoisted out
    of the forward pass so no weight concat is rematerialized per call)."""
    bf16 = jnp.bfloat16

    def prep_self_attn(a):
        wqkv = jnp.concatenate([a["wq"]["w"], a["wk"]["w"], a["wv"]["w"]], 1)
        bqkv = jnp.concatenate([a["wq"]["b"], a["wk"]["b"], a["wv"]["b"]], 0)
        return {"wqkv": wqkv.astype(bf16), "bqkv": bqkv,
                "wo": a["wo"]["w"].astype(bf16), "bo": a["wo"]["b"]}

    def prep_cross_attn(a):
        wkv = jnp.concatenate([a["wk"]["w"], a["wv"]["w"]], 1)
        bkv = jnp.concatenate([a["wk"]["b"], a["wv"]["b"]], 0)
        return {"wq": a["wq"]["w"].astype(bf16), "bq": a["wq"]["b"],
                "wkv": wkv.astype(bf16), "bkv": bkv,
                "wo": a["wo"]["w"].astype(bf16), "bo": a["wo"]["b"]}

    def prep_ffn(f):
        return {"w1": f["w1"]["w"].astype(bf16), "b1": f["w1"]["b"],
                "w2": f["w2"]["w"].astype(bf16), "b2": f["w2"]["b"]}

    enc = [{"attn": prep_self_attn(b["attn"]), "ffn": prep_ffn(b["ffn"]),
            "ln1": b["ln1"], "ln2": b["ln2"]} for b in params["encoder"]]
    dec = [{"self_attn": prep_self_attn(b["self_attn"]),
            "cross_attn": prep_cross_attn(b["cross_attn"]),
            "ffn": prep_ffn(b["ffn"]),
            "ln1": b["ln1"], "ln2": b["ln2"], "ln3": b["ln3"]}
           for b in params["decoder"]]
    return {
        "src_emb": params["src_emb"],
        "tgt_emb": params["tgt_emb"],
        "pos_enc": params["pos_enc"],
        "fc_out": {"w": params["fc_out"]["w"].astype(bf16),
                   "b": params["fc_out"]["b"]},
        "encoder": enc,
        "decoder": dec,
    }


# --------------------------------------------------------------------------
# Main
# --------------------------------------------------------------------------

if __name__ == "__main__":
    # Small toy config for the self-test (launch-overhead bound; the tiling /
    # dtype choices above only pay off at d_model >= 512, seq >= 512).
    vocab_size = 64
    n_seq = 8
    d_model = 32
    n_heads = 4
    n_encoder_blocks = 2
    n_decoder_blocks = 2
    batch = 2

    root = jax.random.PRNGKey(0)
    kp, ksrc, ktgt = jax.random.split(root, 3)
    raw_params = init_transformer(kp, vocab_size, n_seq, d_model,
                                  n_encoder_blocks, n_decoder_blocks)
    params = prepare_params(raw_params)

    src = jax.random.randint(ksrc, (batch, n_seq), 0, vocab_size, jnp.int32)
    tgt = jax.random.randint(ktgt, (batch, n_seq), 0, vocab_size, jnp.int32)

    # masks: 1 = attend, 0 = masked (cast to int8 inside transformer_forward)
    src_mask = jnp.ones((batch, n_seq, n_seq), jnp.float32)
    tgt_mask = jnp.broadcast_to(
        jnp.tril(jnp.ones((n_seq, n_seq), jnp.float32)),
        (batch, n_seq, n_seq))
    src_tgt_mask = jnp.ones((batch, n_seq, n_seq), jnp.float32)

    out = transformer_forward(params, src, tgt, src_mask, tgt_mask,
                              src_tgt_mask, n_heads=n_heads, d_model=d_model)
    out = jax.block_until_ready(out)

    assert out.shape == (batch, n_seq, vocab_size), out.shape
    assert bool(jnp.all(jnp.isfinite(out)))
    print("KERNEL_OK")
</pallas_src>

<mosaic_0001>
module attributes {stable_mosaic.version = 11 : i64} {
  func.func @_linear_kernel(%arg0: i32, %arg1: i32, %arg2: i32, %arg3: memref<16x32xbf16, #tpu.memory_space<vmem>>, %arg4: memref<32x96xbf16, #tpu.memory_space<vmem>>, %arg5: memref<1x96xf32, #tpu.memory_space<vmem>>, %arg6: memref<16x96xbf16, #tpu.memory_space<vmem>>, %arg7: memref<16x96xf32, #tpu.memory_space<vmem>>) attributes {dimension_semantics = [#tpu.dimension_semantics<parallel>, #tpu.dimension_semantics<parallel>, #tpu.dimension_semantics<arbitrary>], iteration_bounds = array<i64: 1, 1, 1>, scalar_prefetch = 0 : i64, scratch_operands = 1 : i64, tpu.core_type = #tpu.core_type<tc>, window_params = [{transform_indices = @transform_0, window_bounds = array<i64: 16, 32>}, {transform_indices = @transform_1, window_bounds = array<i64: 32, 96>}, {transform_indices = @transform_2, window_bounds = array<i64: 1, 96>}, {transform_indices = @transform_3, window_bounds = array<i64: 16, 96>}]} {
    %c0_i32 = arith.constant 0 : i32
    %0 = arith.cmpi eq, %arg2, %c0_i32 : i32
    %1 = arith.extui %0 : i1 to i32
    %c0_i32_0 = arith.constant 0 : i32
    %2 = arith.cmpi ne, %1, %c0_i32_0 : i32
    scf.if %2 {
      %cst_10 = arith.constant 0.000000e+00 : f32
      %12 = vector.broadcast %cst_10 : f32 to vector<16x96xf32>
      %c0_11 = arith.constant 0 : index
      %c0_12 = arith.constant 0 : index
      %13 = vector.load %arg7[%c0_11, %c0_12] : memref<16x96xf32, #tpu.memory_space<vmem>>, vector<16x96xf32>
      tpu.vector_store %arg7[%c0_11, %c0_12], %12 {strides = array<i32>} : memref<16x96xf32, #tpu.memory_space<vmem>>, vector<16x96xf32>,
    } else {
    }
    %c0 = arith.constant 0 : index
    %c0_1 = arith.constant 0 : index
    %3 = vector.load %arg7[%c0, %c0_1] : memref<16x96xf32, #tpu.memory_space<vmem>>, vector<16x96xf32>
    %c0_2 = arith.constant 0 : index
    %c0_3 = arith.constant 0 : index
    %4 = vector.load %arg3[%c0_2, %c0_3] : memref<16x32xbf16, #tpu.memory_space<vmem>>, vector<16x32xbf16>
    %c0_4 = arith.constant 0 : index
    %c0_5 = arith.constant 0 : index
    %5 = vector.load %arg4[%c0_4, %c0_5] : memref<32x96xbf16, #tpu.memory_space<vmem>>, vector<32x96xbf16>
    %cst = arith.constant dense<0.000000e+00> : vector<16x96xf32>
    %6 = tpu.matmul %4, %5, %cst {dimension_numbers = #tpu.dot_dimension_numbers<[1], [0], [0], [1], [0, 0, 1, 1], [], []>} : vector<16x32xbf16>, vector<32x96xbf16>, vector<16x96xf32> -> vector<16x96xf32>
    %7 = arith.addf %3, %6 : vector<16x96xf32>
    %c0_6 = arith.constant 0 : index
    %c0_7 = arith.constant 0 : index
    %8 = vector.load %arg7[%c0_6, %c0_7] : memref<16x96xf32, #tpu.memory_space<vmem>>, vector<16x96xf32>
    tpu.vector_store %arg7[%c0_6, %c0_7], %7 {strides = array<i32>} : memref<16x96xf32, #tpu.memory_space<vmem>>, vector<16x96xf32>,
    %c0_i32_8 = arith.constant 0 : i32
    %9 = arith.cmpi eq, %arg2, %c0_i32_8 : i32
    %10 = arith.extui %9 : i1 to i32
    %c0_i32_9 = arith.constant 0 : i32
    %11 = arith.cmpi ne, %10, %c0_i32_9 : i32
    scf.if %11 {
      %c0_10 = arith.constant 0 : index
      %c0_11 = arith.constant 0 : index
      %12 = vector.load %arg7[%c0_10, %c0_11] : memref<16x96xf32, #tpu.memory_space<vmem>>, vector<16x96xf32>
      %c0_12 = arith.constant 0 : index
      %c0_13 = arith.constant 0 : index
      %13 = vector.load %arg5[%c0_12, %c0_13] : memref<1x96xf32, #tpu.memory_space<vmem>>, vector<1x96xf32>
      %14 = vector.broadcast %13 : vector<1x96xf32> to vector<16x96xf32>
      %15 = arith.addf %12, %14 : vector<16x96xf32>
      %16 = arith.truncf %15 : vector<16x96xf32> to vector<16x96xbf16>
      %c0_14 = arith.constant 0 : index
      %c0_15 = arith.constant 0 : index
      %17 = vector.load %arg6[%c0_14, %c0_15] : memref<16x96xbf16, #tpu.memory_space<vmem>>, vector<16x96xbf16>
      tpu.vector_store %arg6[%c0_14, %c0_15], %16 {strides = array<i32>} : memref<16x96xbf16, #tpu.memory_space<vmem>>, vector<16x96xbf16>,
    } else {
    }
    return
  }
  func.func @transform_0(%arg0: i32, %arg1: i32, %arg2: i32) -> (i32, i32) {
    %c0_i32 = arith.constant 0 : i32
    return %arg0, %arg2 : i32, i32
  }
  func.func @transform_1(%arg0: i32, %arg1: i32, %arg2: i32) -> (i32, i32) {
    %c0_i32 = arith.constant 0 : i32
    return %arg2, %arg1 : i32, i32
  }
  func.func @transform_2(%arg0: i32, %arg1: i32, %arg2: i32) -> (i32, i32) {
    %c0_i32 = arith.constant 0 : i32
    %c0_i32_0 = arith.constant 0 : i32
    return %c0_i32, %arg1 : i32, i32
  }
  func.func @transform_3(%arg0: i32, %arg1: i32, %arg2: i32) -> (i32, i32) {
    %c0_i32 = arith.constant 0 : i32
    return %arg0, %arg1 : i32, i32
  }
}

</mosaic_0001>

<llo_original>
// kernel: tpu_custom_call.1
$region0: #{tpu_custom_call.1}
  #allocation0 [shape = 'u32[]', space=smem, size = 0x4, offset = 0x4, fixed_abs, tag = 'smem constant byte address 0x4 - core index']
  #allocation1 [shape = 'u32[144,128]{1,0:T(1,128)}', space=vmem, size = 0x12000, scoped, tag = 'internal scratch']
  #allocation2 [shape = 'f32[16,96]{1,0:T(8,128)}', space=vmem, size = 0x2000, scoped, tag = 'scratch operand']
  %s0 = inlined_call_operand.hbm [shape: bf16[16,32], index: 0, kind: input, shape index: {}]
  %s1 = inlined_call_operand.hbm [shape: bf16[32,96], index: 1, kind: input, shape index: {}]
  %s2 = inlined_call_operand.vmem [shape: f32[1,96], index: 2, kind: input, shape index: {}]
  %s3 = inlined_call_operand.hbm [shape: bf16[16,96], index: 3, kind: output, shape index: {}]
  %s4 = sld [smem:[#allocation0]]
  $region38: #{tpu_custom_call.1} parent=0
    _
  %s6 = ssub.s32 1, %s4
  %s7 = scalar_select 0, %s6, %s4
  $region1: #{tpu_custom_call.1} parent=0
    #allocation3 [shape = 'u8[4096]{0}', space=vmem, size = 0x1000, scoped, tag = 'input window, operand 0, single buffered']
    #allocation4 [shape = 's32[1]{0}', space=sflag, size = 0x4, scoped, tag = 'scoped memory for tpu_custom_call.1']
    #allocation5 [shape = 's32[1]{0}', space=sflag, size = 0x4, scoped, tag = 'scoped memory for tpu_custom_call.1']
    #allocation6 [shape = 'u8[8192]{0}', space=vmem, size = 0x2000, scoped, tag = 'input window, operand 1, single buffered']
    #allocation7 [shape = 's32[1]{0}', space=sflag, size = 0x4, scoped, tag = 'scoped memory for tpu_custom_call.1']
    #allocation8 [shape = 'u8[4096]{0}', space=vmem, size = 0x1000, scoped, tag = 'output window, operand 0, single buffered']
    %8 = vsyncpa [#allocation4], 0
    %9 = vsyncpa [#allocation7], 0
    %10 = vsyncpa [#allocation5], 0
    // Predicated region
    $region2: #{tpu_custom_call.1} parent=1 // pred_check
      _
    $region3: #{tpu_custom_call.1} parent=1 // pred_check_branch
      %12 = sbr.rel (0) target = $region5
    $region4: #{tpu_custom_call.1} parent=1 // pred_region
      %s14 = ssub.s32 128, 128
      %15 = vsyncadd [#allocation4], %s14
      %s16 = sshll.u32 [#allocation3], 4
      %s17 = int_to_ptr.vmem [resolvable:$true] %s16
      %22 = dma.hbm_to_vmem [thread:$0]  %s0, 128, %s17, [#allocation4], 64, 64, 4
    $region5: #{tpu_custom_call.1} parent=1 // pred_fallthru
      _
    // Predicated region
    $region6: #{tpu_custom_call.1} parent=1 // pred_check
      _
    $region7: #{tpu_custom_call.1} parent=1 // pred_check_branch
      %24 = sbr.rel (0) target = $region9
    $region8: #{tpu_custom_call.1} parent=1 // pred_region
      %s26 = ssub.s32 256, 256
      %27 = vsyncadd [#allocation7], %s26
      %s28 = sshll.u32 [#allocation6], 4
      %s29 = int_to_ptr.vmem [resolvable:$true] %s28
      %34 = dma.hbm_to_vmem [thread:$0]  %s1, 256, %s29, [#allocation7], 64, 64, 4
    $region9: #{tpu_custom_call.1} parent=1 // pred_fallthru
      _
    // Predicated region
    $region10: #{tpu_custom_call.1} parent=1 // pred_check
      _
    $region11: #{tpu_custom_call.1} parent=1 // pred_check_branch
      %36 = sbr.rel (0) target = $region13
    $region12: #{tpu_custom_call.1} parent=1 // pred_region
      _
    $region13: #{tpu_custom_call.1} parent=1 // pred_fallthru
      _
    // Predicated region
    $region14: #{tpu_custom_call.1} parent=1 // pred_check
      _
    $region15: #{tpu_custom_call.1} parent=1 // pred_check_branch
      %38 = sbr.rel (0) target = $region17
    $region16: #{tpu_custom_call.1} parent=1 // pred_region
      %39 = dma.done [#allocation4], 128
    $region17: #{tpu_custom_call.1} parent=1 // pred_fallthru
      _
    // Predicated region
    $region18: #{tpu_custom_call.1} parent=1 // pred_check
      _
    $region19: #{tpu_custom_call.1} parent=1 // pred_check_branch
      %41 = sbr.rel (0) target = $region21
    $region20: #{tpu_custom_call.1} parent=1 // pred_region
      %42 = dma.done [#allocation7], 256
    $region21: #{tpu_custom_call.1} parent=1 // pred_fallthru
      _
    %p44 = scmp.eq.s32.totalorder 0, 0
    // Predicated region
    $region22: #{tpu_custom_call.1} parent=1 // pred_check
      %p45 = pneg %p44
    $region23: #{tpu_custom_call.1} parent=1 // pred_check_branch
      %47 = sbr.rel (%p45) target = $region25
    $region24: #{tpu_custom_call.1} parent=1 // pred_region
      %vm48 = vcmask 785408
      %49 = vst.msk [vmem:[#allocation2] sm:$0xff] %vm48, 0.0
      %50 = vst.msk [vmem:[#allocation2 + $0x8] sm:$0xff] %vm48, 0.0
    $region25: #{tpu_custom_call.1} parent=1 // pred_fallthru
      _
    %v51 = vld [vmem:[#allocation2] sm:$0xff]
    %v52 = vld [vmem:[#allocation2 + $0x8] sm:$0xff]
    %v53 = vld [vmem:[#allocation3] sm:$0xf]
    %v54 = vld [vmem:[#allocation3 + $0x4] sm:$0xf]
    %v55 = vld [vmem:[#allocation6] sm:$0xf]
    %v56 = vld [vmem:[#allocation6 + $0x4] sm:$0xf]
    %v57 = vld [vmem:[#allocation6 + $0x8] sm:$0xf]
    %v58 = vld [vmem:[#allocation6 + $0xc] sm:$0xf]
    %v61 = vunpack.c.l.b16 %v53
    %v62 = vunpack.c.l.b16 %v54
    %v63 = vpack.c.b16 %v62, %v61
    %v68 = vunpack.c.l.b16 %v55
    %v69 = vunpack.c.l.b16 %v56
    %v70 = vunpack.c.l.b16 %v57
    %v71 = vunpack.c.l.b16 %v58
    %v72 = vpack.c.b16 %v69, %v68
    %v73 = vpack.c.b16 %v71, %v70
    %vm76 = vcmask 261120
    %v78 = vsel %vm76, %v63, 0
    %80 = vmatprep.subr.bf16.mxu0 0
    %81 = vmatpush1.bf16.msra.mxu0 0
    %82 = vmatprep.subr.bf16.mxu0 0
    %83 = vmatpush1.bf16.msra.mxu0 0
    %84 = vmatprep.subr.bf16.mxu0 0
    %85 = vmatpush1.bf16.msra.mxu0 0
    %86 = vmatprep.subr.bf16.mxu0 0
    %87 = vmatpush1.bf16.msra.mxu0 0
    %88 = vmatprep.subr.bf16.mxu0 0
    %89 = vmatpush1.bf16.msra.mxu0 0
    %90 = vmatprep.subr.bf16.mxu0 0
    %91 = vmatpush1.bf16.msra.mxu0 0
    %92 = vmatprep.subr.bf16.mxu0 0
    %93 = vmatpush1.bf16.msra.mxu0 %v73
    %94 = vmatprep.subr.bf16.mxu0 0
    %95 = vmatpush1.bf16.msra.mxu0 %v72
    %96 = vmatprep.subr.bf16.mxu0 0
    %97 = vmatpush2.bf16.msra.mxu0 0
    %98 = vmatprep.subr.bf16.mxu0 0
    %99 = vmatpush2.bf16.msra.mxu0 0
    %100 = vmatprep.subr.bf16.mxu0 0
    %101 = vmatpush2.bf16.msra.mxu0 0
    %102 = vmatprep.subr.bf16.mxu0 0
    %103 = vmatpush2.bf16.msra.mxu0 0
    %104 = vmatprep.subr.bf16.mxu0 0
    %105 = vmatpush2.bf16.msra.mxu0 0
    %106 = vmatprep.subr.bf16.mxu0 0
    %107 = vmatpush2.bf16.msra.mxu0 0
    %108 = vmatprep.subr.bf16.mxu0 0
    %109 = vmatpush2.bf16.msra.mxu0 0
    %110 = vmatprep.subr.bf16.mxu0 0
    %111 = vmatpush2.bf16.msra.mxu0 0
    %112 = vmatprep.mubr.bf16.mxu0 0
    %113 = vmatmul.mubr.bf16.gmra.mxu0 %v78
    %v114 = vpop.f32.mrf.mxu0
    %v115 = vadd.f32 0.0, %v114
    %v116 = vpop.f32.mrf.mxu0
    %v117 = vpop.f32.mrf.mxu0
    %v118 = vadd.f32 0.0, %v117
    %v119 = vpop.f32.mrf.mxu0
    %120 = vdwg.mxu0
    %v121 = vadd.f32 %v51, %v115
    %v122 = vadd.f32 %v52, %v118
    %vm123 = vcmask 785408
    %124 = vst.msk [vmem:[#allocation2] sm:$0xff] %vm123, %v121
    %125 = vst.msk [vmem:[#allocation2 + $0x8] sm:$0xff] %vm123, %v122
    // Predicated region
    $region26: #{tpu_custom_call.1} parent=1 // pred_check
      %p126 = pneg %p44
    $region27: #{tpu_custom_call.1} parent=1 // pred_check_branch
      %128 = sbr.rel (%p126) target = $region29
    $region28: #{tpu_custom_call.1} parent=1 // pred_region
      %v129 = vld [vmem:[#allocation2] sm:$0xff]
      %v130 = vld [vmem:[#allocation2 + $0x8] sm:$0xff]
      %v131 = vld [vmem:[%s2] sm:$0x1]
      %v133 = vlaneseq
      %v134 = vshrl.u32 %v133, 7
      %v135 = vsub.s32 0, %v134
      %v136 = vrot.slane %v131, %v135
      %v138 = vadd.f32 %v129, %v136
      %v139 = vadd.f32 %v130, %v136
      %v140 = vpack.c.bf16 %v139, %v138
      %v142 = vunpack.c.l.b16 %v140
      %v143 = vunpack.c.h.b16 %v140
      %v144 = vpack.c.b16 %v142, %v142
      %v145 = vpack.c.b16 %v143, %v143
      %vm148 = vcmask 781312
      %149 = vst.msk [vmem:[#allocation8] sm:$0xf] %vm148, %v144
      %150 = vst.msk [vmem:[#allocation8 + $0x4] sm:$0xf] %vm148, %v145
    $region29: #{tpu_custom_call.1} parent=1 // pred_fallthru
      _
    // Predicated region
    $region30: #{tpu_custom_call.1} parent=1 // pred_check
      _
    $region31: #{tpu_custom_call.1} parent=1 // pred_check_branch
      %152 = sbr.rel (0) target = $region33
    $region32: #{tpu_custom_call.1} parent=1 // pred_region
      %s154 = ssub.s32 128, 128
      %155 = vsyncadd [#allocation5], %s154
      %s156 = sshll.u32 [#allocation8], 4
      %s157 = int_to_ptr.vmem [resolvable:$true] %s156
      %162 = dma.vmem_to_hbm [thread:$0]  %s157, 128, %s3, [#allocation5], 64, 64, 4
    $region33: #{tpu_custom_call.1} parent=1 // pred_fallthru
      _
    // Predicated region
    $region34: #{tpu_custom_call.1} parent=1 // pred_check
      _
    $region35: #{tpu_custom_call.1} parent=1 // pred_check_branch
      %164 = sbr.rel (0) target = $region37
    $region36: #{tpu_custom_call.1} parent=1 // pred_region
      %165 = dma.done [#allocation5], 128
    $region37: #{tpu_custom_call.1} parent=1 // pred_fallthru
      _
    %166 = vsyncpa [#allocation4], 1
    %167 = vsyncpa [#allocation7], 1
    %168 = vsyncpa [#allocation5], 1

</llo_original>
